<compile_context>
chip_gen: v7x
topology: tpu7x:2x2x1
jax: 0.10.0
libtpu: 0.0.40
codegen_flags: <defaults>
</compile_context>

<pallas_src>
import math
import functools

import jax
import jax.numpy as jnp
from jax import lax
from jax.experimental import pallas as pl
from jax.experimental.pallas import tpu as pltpu


# ----------------------------------------------------------------------------
# Per-generation configuration
# ----------------------------------------------------------------------------
def _vmem_capacity_bytes():
    try:
        return int(pltpu.get_tpu_info().vmem_capacity_bytes)
    except Exception:
        return 64 * 1024 * 1024                 # conservative (v7x-sized) default


_VMEM_CAP = _vmem_capacity_bytes()
if _VMEM_CAP >= 128 * 1024 * 1024:              # v5e / v6e: 128 MiB physical VMEM
    VMEM_LIMIT_BYTES = 96 * 1024 * 1024
    _TM, _TN, _TK = 512, 512, 1024              # wide tiles: fewer grid steps, less HBM re-streaming
else:                                           # v7x: 64 MiB physical VMEM
    VMEM_LIMIT_BYTES = 48 * 1024 * 1024
    _TM, _TN, _TK = 512, 512, 512

# Attention tiles: tq=256 keeps >=2 parallel blocks for v7x megacore on small
# batches and bounds vreg pressure; tkv bounds K/V residency and the score tile.
_TQ, _TKV = 256, 512

_MASK_BIAS = -3.0e38          # additive mask bias; representable in bf16/f32
APPROX_RECIPROCAL = True      # EUP vrcp (~1e-3 rel. err). Set False for exact division.


def _pick_tile(full, cap, align):
    """Largest legal tile <= cap: the full dim if it fits, otherwise the biggest
    `align`-multiple divisor of `full`; falls back to `full` for ragged dims."""
    if full <= cap:
        return full
    t = (cap // align) * align
    while t >= align:
        if full % t == 0:
            return t
        t -= align
    return full


# ----------------------------------------------------------------------------
# Kernel 1: tiled dense layer  y = x @ W_t + b   (W_t is (in, out))
# ----------------------------------------------------------------------------
def _linear_kernel(x_ref, w_ref, b_ref, o_ref, acc_ref):
    @pl.when(pl.program_id(2) == 0)
    def _():
        acc_ref[...] = jnp.zeros_like(acc_ref)

    acc_ref[...] += jnp.dot(x_ref[...], w_ref[...],
                            preferred_element_type=jnp.float32)

    @pl.when(pl.program_id(2) == pl.num_programs(2) - 1)
    def _():
        o_ref[...] = (acc_ref[...] + b_ref[...]).astype(o_ref.dtype)


def linear(x, w_t, b, out_dtype):
    """x: (M, K), w_t: (K, N), b: (N,) f32 -> (M, N) out_dtype."""
    M, K = x.shape
    N = w_t.shape[1]
    tm = _pick_tile(M, _TM, 8)
    tn = _pick_tile(N, _TN, 128)
    tk = _pick_tile(K, _TK, 128)
    return pl.pallas_call(
        _linear_kernel,
        out_shape=jax.ShapeDtypeStruct((M, N), out_dtype),
        grid=(M // tm, N // tn, K // tk),
        in_specs=[
            pl.BlockSpec((tm, tk), lambda i, j, k: (i, k)),
            pl.BlockSpec((tk, tn), lambda i, j, k: (k, j)),
            pl.BlockSpec((1, tn), lambda i, j, k: (0, j)),
        ],
        out_specs=pl.BlockSpec((tm, tn), lambda i, j, k: (i, j)),
        scratch_shapes=[pltpu.VMEM((tm, tn), jnp.float32)],
        compiler_params=pltpu.CompilerParams(
            dimension_semantics=("parallel", "parallel", "arbitrary"),
            vmem_limit_bytes=VMEM_LIMIT_BYTES),
    )(x, w_t, b.reshape(1, N).astype(jnp.float32))


# ----------------------------------------------------------------------------
# Kernel 2: flash-style attention.  Grid = (batch, q-tile, kv-tile); heads are
# an unrolled loop inside; online softmax with f32 VMEM running stats.
# ----------------------------------------------------------------------------
def _attention_kernel(q_ref, k_ref, v_ref, bias_ref, o_ref,
                      m_sc, l_sc, acc_sc, *, num_heads):
    kv = pl.program_id(2)

    @pl.when(kv == 0)
    def _():
        m_sc[...] = jnp.full_like(m_sc, -jnp.inf)
        l_sc[...] = jnp.zeros_like(l_sc)
        acc_sc[...] = jnp.zeros_like(acc_sc)

    D = q_ref.shape[2]
    dk = D // num_heads

    q2 = q_ref[0]                                 # (tq,  D) bf16 (1/sqrt(dk) folded into W_q)
    k2 = k_ref[0]                                 # (tkv, D) bf16
    v2 = v_ref[0]                                 # (tkv, D) bf16
    bias = bias_ref[0].astype(jnp.float32)        # (1, tkv) or (tq, tkv) additive mask bias

    for h in range(num_heads):                    # static, unrolled over heads
        sl = slice(h * dk, (h + 1) * dk)
        qh, kh, vh = q2[:, sl], k2[:, sl], v2[:, sl]
        # contract d_k of both operands directly (no explicit kh.T / XLU transpose)
        s = lax.dot_general(qh, kh, (((1,), (1,)), ((), ())),
                            preferred_element_type=jnp.float32)     # (tq, tkv) f32
        s = s + bias
        m_prev = m_sc[h]                                             # (tq, 1)
        m_new = jnp.maximum(m_prev, jnp.max(s, axis=-1, keepdims=True))
        alpha = jnp.exp(m_prev - m_new)                              # (tq, 1)
        p = jnp.exp(s - m_new)                                       # (tq, tkv) f32
        l_sc[h] = alpha * l_sc[h] + jnp.sum(p, axis=-1, keepdims=True)
        acc_sc[h] = alpha * acc_sc[h] + jnp.dot(p.astype(vh.dtype), vh,
                                                preferred_element_type=jnp.float32)
        m_sc[h] = m_new

    @pl.when(kv == pl.num_programs(2) - 1)
    def _():
        # Deferred normalization: reciprocal is applied to the (tq, dk) head
        # output, not the (tq, tkv) probabilities.
        if APPROX_RECIPROCAL:
            outs = [acc_sc[h] * pl.reciprocal(l_sc[h], approx=True)
                    for h in range(num_heads)]
        else:
            outs = [acc_sc[h] / l_sc[h] for h in range(num_heads)]
        # single lane-dense store: concat heads back to (tq, D)
        o_ref[0] = jnp.concatenate(outs, axis=-1).astype(o_ref.dtype)


def attention(q3, k3, v3, mask_bias, num_heads, d_model, out_dtype,
              col_blocks=(0, 0, 0)):
    """q3: (B, L1, Cq), k3/v3: (B, L2, Ck/Cv).  The D-wide column block
    `col_blocks[i]` of the last dim selects the actual q/k/v activations, which
    lets a fused (B, L1, 3D) QKV projection be consumed without slicing.
    mask_bias: (B, 1, L2) or (B, L1, L2) additive bias (bf16)."""
    B, L1 = q3.shape[0], q3.shape[1]
    L2 = k3.shape[1]
    D = d_model
    dk = D // num_heads
    tq = _pick_tile(L1, _TQ, 8)
    tkv = _pick_tile(L2, _TKV, 128)
    qc, kc, vc = col_blocks

    if mask_bias.shape[1] == 1:                  # key-padding mask, broadcast over rows
        m_spec = pl.BlockSpec((1, 1, tkv), lambda b, qi, kvi: (b, 0, kvi))
    else:                                        # full (B, L1, L2) mask
        m_spec = pl.BlockSpec((1, tq, tkv), lambda b, qi, kvi: (b, qi, kvi))

    kernel = functools.partial(_attention_kernel, num_heads=num_heads)
    return pl.pallas_call(
        kernel,
        out_shape=jax.ShapeDtypeStruct((B, L1, D), out_dtype),
        grid=(B, L1 // tq, L2 // tkv),
        in_specs=[
            pl.BlockSpec((1, tq, D), lambda b, qi, kvi: (b, qi, qc)),
            pl.BlockSpec((1, tkv, D), lambda b, qi, kvi: (b, kvi, kc)),
            pl.BlockSpec((1, tkv, D), lambda b, qi, kvi: (b, kvi, vc)),
            m_spec,
        ],
        out_specs=pl.BlockSpec((1, tq, D), lambda b, qi, kvi: (b, qi, 0)),
        scratch_shapes=[
            pltpu.VMEM((num_heads, tq, 1), jnp.float32),    # running max
            pltpu.VMEM((num_heads, tq, 1), jnp.float32),    # running sum
            pltpu.VMEM((num_heads, tq, dk), jnp.float32),   # PV accumulator
        ],
        compiler_params=pltpu.CompilerParams(
            dimension_semantics=("parallel", "parallel", "arbitrary"),
            vmem_limit_bytes=VMEM_LIMIT_BYTES),
    )(q3, k3, v3, mask_bias)


# ----------------------------------------------------------------------------
# Parameters & module wrapper
# ----------------------------------------------------------------------------
def init_params(key, d_model, num_heads):
    assert d_model % num_heads == 0
    bound = 1.0 / math.sqrt(d_model)
    keys = jax.random.split(key, 8)
    u = lambda kk, shape: jax.random.uniform(kk, shape, jnp.float32, -bound, bound)
    return {
        "h": num_heads, "d_model": d_model,
        # torch nn.Linear convention: weight is (out_features, in_features)
        "w_q": u(keys[0], (d_model, d_model)), "b_q": u(keys[1], (d_model,)),
        "w_k": u(keys[2], (d_model, d_model)), "b_k": u(keys[3], (d_model,)),
        "w_v": u(keys[4], (d_model, d_model)), "b_v": u(keys[5], (d_model,)),
        "w_o": u(keys[6], (d_model, d_model)), "b_o": u(keys[7], (d_model,)),
    }


def prepare_params(params, matmul_dtype=jnp.bfloat16):
    """One-time weight prep: fold 1/sqrt(dk) into W_q/b_q (f32), transpose to
    (in, out), cast matmul operands to bf16, pre-fuse q/k/v into (D, 3D)."""
    d_model, h = params["d_model"], params["h"]
    scale = 1.0 / math.sqrt(d_model // h)
    w_q = params["w_q"] * scale
    b_q = params["b_q"] * scale
    t = lambda w: jnp.asarray(w.T, dtype=matmul_dtype)
    prep = {
        "h": h, "d_model": d_model, "matmul_dtype": matmul_dtype,
        "w_q_t": t(w_q), "w_k_t": t(params["w_k"]),
        "w_v_t": t(params["w_v"]), "w_o_t": t(params["w_o"]),
        "b_q": b_q, "b_k": params["b_k"],
        "b_v": params["b_v"], "b_o": params["b_o"],
    }
    prep["w_qkv_t"] = jnp.concatenate(
        [prep["w_q_t"], prep["w_k_t"], prep["w_v_t"]], axis=1)      # (D, 3D)
    prep["b_qkv"] = jnp.concatenate(
        [b_q, params["b_k"], params["b_v"]], axis=0)                # (3D,)
    return prep


def _mask_to_bias(mask, B, L2):
    """Convert the 0/1 mask once (wrapper side) to an additive bf16 bias:
    0 where attended, _MASK_BIAS where masked (matches torch's finfo.min fill,
    i.e. fully-masked rows give a uniform distribution)."""
    if mask.ndim == 2:
        m = mask.reshape(B, 1, L2)
    else:
        m = mask
    return jnp.where(m == 0, _MASK_BIAS, 0.0).astype(jnp.bfloat16)


def multi_head_attention(prep, q, k, v, mask):
    B, L1, D = q.shape
    L2 = k.shape[1]
    H = prep["h"]
    cdtype = prep["matmul_dtype"]
    bias = _mask_to_bias(mask, B, L2)

    if (q is k) and (k is v) and (D % 128 == 0):
        # self-attention: single fused (D, 3D) projection; its (B, L1, 3D)
        # output goes straight into the attention kernel (column blocks 0/1/2),
        # avoiding an extra HBM write+read of sliced q/k/v activations.
        x2 = q.reshape(B * L1, D).astype(cdtype)
        qkv = linear(x2, prep["w_qkv_t"], prep["b_qkv"], out_dtype=cdtype)
        qkv3 = qkv.reshape(B, L1, 3 * D)
        out_h = attention(qkv3, qkv3, qkv3, bias, H, D, out_dtype=cdtype,
                          col_blocks=(0, 1, 2))
    else:
        qp = linear(q.reshape(B * L1, D).astype(cdtype), prep["w_q_t"], prep["b_q"], cdtype)
        kp = linear(k.reshape(B * L2, D).astype(cdtype), prep["w_k_t"], prep["b_k"], cdtype)
        vp = linear(v.reshape(B * L2, D).astype(cdtype), prep["w_v_t"], prep["b_v"], cdtype)
        out_h = attention(qp.reshape(B, L1, D), kp.reshape(B, L2, D),
                          vp.reshape(B, L2, D), bias, H, D, out_dtype=cdtype)

    out = linear(out_h.reshape(B * L1, D), prep["w_o_t"], prep["b_o"],
                 out_dtype=jnp.float32)
    return out.reshape(B, L1, D)


# ----------------------------------------------------------------------------
# Pure-JAX f32 reference (torch semantics) for the sanity check
# ----------------------------------------------------------------------------
def reference(params, q, k, v, mask):
    B, L1, D = q.shape
    L2 = k.shape[1]
    H = params["h"]
    dk = D // H
    lin = lambda x, w, b: x @ w.T + b
    qh = lin(q, params["w_q"], params["b_q"]).reshape(B, L1, H, dk).transpose(0, 2, 1, 3)
    kh = lin(k, params["w_k"], params["b_k"]).reshape(B, L2, H, dk).transpose(0, 2, 1, 3)
    vh = lin(v, params["w_v"], params["b_v"]).reshape(B, L2, H, dk).transpose(0, 2, 1, 3)
    s = jnp.einsum("bhqd,bhkd->bhqk", qh, kh) / math.sqrt(dk)
    if mask.ndim == 2:
        m4 = jnp.broadcast_to(mask[:, None, None, :], s.shape)
    else:
        m4 = jnp.broadcast_to(mask[:, None, :, :], s.shape)
    s = jnp.where(m4 == 0, jnp.finfo(jnp.float32).min, s)
    p = jax.nn.softmax(s, axis=-1)
    o = jnp.einsum("bhqk,bhkd->bhqd", p, vh).transpose(0, 2, 1, 3).reshape(B, L1, D)
    return lin(o, params["w_o"], params["b_o"])


if __name__ == "__main__":
    B, L, D, H = 2, 8, 128, 4

    key = jax.random.PRNGKey(0)
    kpar, kx, kq, kk_, kv_ = jax.random.split(key, 5)
    params = init_params(kpar, d_model=D, num_heads=H)
    prep = prepare_params(params)

    # --- test 1: self-attention (fused QKV column-block path), (B, L) key-padding mask
    x = jax.random.normal(kx, (B, L, D), jnp.float32)
    lengths = jnp.array([L, 5], dtype=jnp.int32)
    mask2d = (jnp.arange(L)[None, :] < lengths[:, None]).astype(jnp.int32)    # (B, L)
    out1 = jax.block_until_ready(multi_head_attention(prep, x, x, x, mask2d))
    ref1 = reference(params, x, x, x, mask2d)
    assert out1.shape == (B, L, D)
    assert jnp.allclose(out1, ref1, atol=5e-2, rtol=5e-2), "mismatch (self-attn)"

    # --- test 2: cross-attention (separate projections), (B, L1, L2) mask
    L1, L2 = 8, 16
    q = jax.random.normal(kq, (B, L1, D), jnp.float32)
    k = jax.random.normal(kk_, (B, L2, D), jnp.float32)
    v = jax.random.normal(kv_, (B, L2, D), jnp.float32)
    mask3d = jnp.broadcast_to(
        (jnp.arange(L2)[None, None, :] <= 2 * jnp.arange(L1)[None, :, None] + 1),
        (B, L1, L2)).astype(jnp.int32)
    out2 = jax.block_until_ready(multi_head_attention(prep, q, k, v, mask3d))
    ref2 = reference(params, q, k, v, mask3d)
    assert out2.shape == (B, L1, D)
    assert jnp.allclose(out2, ref2, atol=5e-2, rtol=5e-2), "mismatch (cross-attn)"

    print("KERNEL_OK")
</pallas_src>

<mosaic_0001>
module attributes {stable_mosaic.version = 11 : i64} {
  func.func @_linear_kernel(%arg0: i32, %arg1: i32, %arg2: i32, %arg3: memref<16x128xbf16, #tpu.memory_space<vmem>>, %arg4: memref<128x384xbf16, #tpu.memory_space<vmem>>, %arg5: memref<1x384xf32, #tpu.memory_space<vmem>>, %arg6: memref<16x384xbf16, #tpu.memory_space<vmem>>, %arg7: memref<16x384xf32, #tpu.memory_space<vmem>>) attributes {dimension_semantics = [#tpu.dimension_semantics<parallel>, #tpu.dimension_semantics<parallel>, #tpu.dimension_semantics<arbitrary>], iteration_bounds = array<i64: 1, 1, 1>, scalar_prefetch = 0 : i64, scratch_operands = 1 : i64, tpu.core_type = #tpu.core_type<tc>, window_params = [{transform_indices = @transform_0, window_bounds = array<i64: 16, 128>}, {transform_indices = @transform_1, window_bounds = array<i64: 128, 384>}, {transform_indices = @transform_2, window_bounds = array<i64: 1, 384>}, {transform_indices = @transform_3, window_bounds = array<i64: 16, 384>}]} {
    %c0_i32 = arith.constant 0 : i32
    %0 = arith.cmpi eq, %arg2, %c0_i32 : i32
    %1 = arith.extui %0 : i1 to i32
    %c0_i32_0 = arith.constant 0 : i32
    %2 = arith.cmpi ne, %1, %c0_i32_0 : i32
    scf.if %2 {
      %cst_10 = arith.constant 0.000000e+00 : f32
      %12 = vector.broadcast %cst_10 : f32 to vector<16x384xf32>
      %c0_11 = arith.constant 0 : index
      %c0_12 = arith.constant 0 : index
      %13 = vector.load %arg7[%c0_11, %c0_12] : memref<16x384xf32, #tpu.memory_space<vmem>>, vector<16x384xf32>
      tpu.vector_store %arg7[%c0_11, %c0_12], %12 {strides = array<i32>} : memref<16x384xf32, #tpu.memory_space<vmem>>, vector<16x384xf32>,
    } else {
    }
    %c0 = arith.constant 0 : index
    %c0_1 = arith.constant 0 : index
    %3 = vector.load %arg7[%c0, %c0_1] : memref<16x384xf32, #tpu.memory_space<vmem>>, vector<16x384xf32>
    %c0_2 = arith.constant 0 : index
    %c0_3 = arith.constant 0 : index
    %4 = vector.load %arg3[%c0_2, %c0_3] : memref<16x128xbf16, #tpu.memory_space<vmem>>, vector<16x128xbf16>
    %c0_4 = arith.constant 0 : index
    %c0_5 = arith.constant 0 : index
    %5 = vector.load %arg4[%c0_4, %c0_5] : memref<128x384xbf16, #tpu.memory_space<vmem>>, vector<128x384xbf16>
    %cst = arith.constant dense<0.000000e+00> : vector<16x384xf32>
    %6 = tpu.matmul %4, %5, %cst {dimension_numbers = #tpu.dot_dimension_numbers<[1], [0], [0], [1], [0, 0, 1, 1], [], []>} : vector<16x128xbf16>, vector<128x384xbf16>, vector<16x384xf32> -> vector<16x384xf32>
    %7 = arith.addf %3, %6 : vector<16x384xf32>
    %c0_6 = arith.constant 0 : index
    %c0_7 = arith.constant 0 : index
    %8 = vector.load %arg7[%c0_6, %c0_7] : memref<16x384xf32, #tpu.memory_space<vmem>>, vector<16x384xf32>
    tpu.vector_store %arg7[%c0_6, %c0_7], %7 {strides = array<i32>} : memref<16x384xf32, #tpu.memory_space<vmem>>, vector<16x384xf32>,
    %c0_i32_8 = arith.constant 0 : i32
    %9 = arith.cmpi eq, %arg2, %c0_i32_8 : i32
    %10 = arith.extui %9 : i1 to i32
    %c0_i32_9 = arith.constant 0 : i32
    %11 = arith.cmpi ne, %10, %c0_i32_9 : i32
    scf.if %11 {
      %c0_10 = arith.constant 0 : index
      %c0_11 = arith.constant 0 : index
      %12 = vector.load %arg7[%c0_10, %c0_11] : memref<16x384xf32, #tpu.memory_space<vmem>>, vector<16x384xf32>
      %c0_12 = arith.constant 0 : index
      %c0_13 = arith.constant 0 : index
      %13 = vector.load %arg5[%c0_12, %c0_13] : memref<1x384xf32, #tpu.memory_space<vmem>>, vector<1x384xf32>
      %14 = vector.broadcast %13 : vector<1x384xf32> to vector<16x384xf32>
      %15 = arith.addf %12, %14 : vector<16x384xf32>
      %16 = arith.truncf %15 : vector<16x384xf32> to vector<16x384xbf16>
      %c0_14 = arith.constant 0 : index
      %c0_15 = arith.constant 0 : index
      %17 = vector.load %arg6[%c0_14, %c0_15] : memref<16x384xbf16, #tpu.memory_space<vmem>>, vector<16x384xbf16>
      tpu.vector_store %arg6[%c0_14, %c0_15], %16 {strides = array<i32>} : memref<16x384xbf16, #tpu.memory_space<vmem>>, vector<16x384xbf16>,
    } else {
    }
    return
  }
  func.func @transform_0(%arg0: i32, %arg1: i32, %arg2: i32) -> (i32, i32) {
    %c0_i32 = arith.constant 0 : i32
    return %arg0, %arg2 : i32, i32
  }
  func.func @transform_1(%arg0: i32, %arg1: i32, %arg2: i32) -> (i32, i32) {
    %c0_i32 = arith.constant 0 : i32
    return %arg2, %arg1 : i32, i32
  }
  func.func @transform_2(%arg0: i32, %arg1: i32, %arg2: i32) -> (i32, i32) {
    %c0_i32 = arith.constant 0 : i32
    %c0_i32_0 = arith.constant 0 : i32
    return %c0_i32, %arg1 : i32, i32
  }
  func.func @transform_3(%arg0: i32, %arg1: i32, %arg2: i32) -> (i32, i32) {
    %c0_i32 = arith.constant 0 : i32
    return %arg0, %arg1 : i32, i32
  }
}

</mosaic_0001>

<llo_original>
// kernel: tpu_custom_call.1
$region0: #{tpu_custom_call.1}
  #allocation0 [shape = 'u32[]', space=smem, size = 0x4, offset = 0x4, fixed_abs, tag = 'smem constant byte address 0x4 - core index']
  #allocation1 [shape = 'u32[144,128]{1,0:T(1,128)}', space=vmem, size = 0x12000, scoped, tag = 'internal scratch']
  #allocation2 [shape = 'f32[16,384]{1,0:T(8,128)}', space=vmem, size = 0x6000, scoped, tag = 'scratch operand']
  %s0 = inlined_call_operand.hbm [shape: bf16[16,128], index: 0, kind: input, shape index: {}]
  %s1 = inlined_call_operand.hbm [shape: bf16[128,384], index: 1, kind: input, shape index: {}]
  %s2 = inlined_call_operand.vmem [shape: f32[1,384], index: 2, kind: input, shape index: {}]
  %s3 = inlined_call_operand.hbm [shape: bf16[16,384], index: 3, kind: output, shape index: {}]
  %s4 = sld [smem:[#allocation0]]
  $region38: #{tpu_custom_call.1} parent=0
    _
  %s6 = ssub.s32 1, %s4
  %s7 = scalar_select 0, %s6, %s4
  $region1: #{tpu_custom_call.1} parent=0
    #allocation3 [shape = 'u8[4096]{0}', space=vmem, size = 0x1000, scoped, tag = 'input window, operand 0, single buffered']
    #allocation4 [shape = 's32[1]{0}', space=sflag, size = 0x4, scoped, tag = 'scoped memory for tpu_custom_call.1']
    #allocation5 [shape = 's32[1]{0}', space=sflag, size = 0x4, scoped, tag = 'scoped memory for tpu_custom_call.1']
    #allocation6 [shape = 'u8[98304]{0}', space=vmem, size = 0x18000, scoped, tag = 'input window, operand 1, single buffered']
    #allocation7 [shape = 's32[1]{0}', space=sflag, size = 0x4, scoped, tag = 'scoped memory for tpu_custom_call.1']
    #allocation8 [shape = 'u8[12288]{0}', space=vmem, size = 0x3000, scoped, tag = 'output window, operand 0, single buffered']
    %8 = vsyncpa [#allocation4], 0
    %9 = vsyncpa [#allocation7], 0
    %10 = vsyncpa [#allocation5], 0
    // Predicated region
    $region2: #{tpu_custom_call.1} parent=1 // pred_check
      _
    $region3: #{tpu_custom_call.1} parent=1 // pred_check_branch
      %12 = sbr.rel (0) target = $region5
    $region4: #{tpu_custom_call.1} parent=1 // pred_region
      %s14 = ssub.s32 128, 128
      %15 = vsyncadd [#allocation4], %s14
      %s16 = sshll.u32 [#allocation3], 4
      %s17 = int_to_ptr.vmem [resolvable:$true] %s16
      %22 = dma.hbm_to_vmem [thread:$0]  %s0, 128, %s17, [#allocation4], 64, 64, 4
    $region5: #{tpu_custom_call.1} parent=1 // pred_fallthru
      _
    // Predicated region
    $region6: #{tpu_custom_call.1} parent=1 // pred_check
      _
    $region7: #{tpu_custom_call.1} parent=1 // pred_check_branch
      %24 = sbr.rel (0) target = $region9
    $region8: #{tpu_custom_call.1} parent=1 // pred_region
      %s26 = ssub.s32 3072, 3072
      %27 = vsyncadd [#allocation7], %s26
      %s28 = sshll.u32 [#allocation6], 4
      %s29 = int_to_ptr.vmem [resolvable:$true] %s28
      %34 = dma.hbm_to_vmem [thread:$0]  %s1, 3072, %s29, [#allocation7], 192, 192, 12
    $region9: #{tpu_custom_call.1} parent=1 // pred_fallthru
      _
    // Predicated region
    $region10: #{tpu_custom_call.1} parent=1 // pred_check
      _
    $region11: #{tpu_custom_call.1} parent=1 // pred_check_branch
      %36 = sbr.rel (0) target = $region13
    $region12: #{tpu_custom_call.1} parent=1 // pred_region
      _
    $region13: #{tpu_custom_call.1} parent=1 // pred_fallthru
      _
    // Predicated region
    $region14: #{tpu_custom_call.1} parent=1 // pred_check
      _
    $region15: #{tpu_custom_call.1} parent=1 // pred_check_branch
      %38 = sbr.rel (0) target = $region17
    $region16: #{tpu_custom_call.1} parent=1 // pred_region
      %39 = dma.done [#allocation4], 128
    $region17: #{tpu_custom_call.1} parent=1 // pred_fallthru
      _
    // Predicated region
    $region18: #{tpu_custom_call.1} parent=1 // pred_check
      _
    $region19: #{tpu_custom_call.1} parent=1 // pred_check_branch
      %41 = sbr.rel (0) target = $region21
    $region20: #{tpu_custom_call.1} parent=1 // pred_region
      %42 = dma.done [#allocation7], 3072
    $region21: #{tpu_custom_call.1} parent=1 // pred_fallthru
      _
    %p44 = scmp.eq.s32.totalorder 0, 0
    // Predicated region
    $region22: #{tpu_custom_call.1} parent=1 // pred_check
      %p45 = pneg %p44
    $region23: #{tpu_custom_call.1} parent=1 // pred_check_branch
      %47 = sbr.rel (%p45) target = $region25
    $region24: #{tpu_custom_call.1} parent=1 // pred_region
      %48 = vst [vmem:[#allocation2] sm:$0xff] 0.0
      %49 = vst [vmem:[#allocation2 + $0x8] sm:$0xff] 0.0
      %50 = vst [vmem:[#allocation2 + $0x10] sm:$0xff] 0.0
      %51 = vst [vmem:[#allocation2 + $0x18] sm:$0xff] 0.0
      %52 = vst [vmem:[#allocation2 + $0x20] sm:$0xff] 0.0
      %53 = vst [vmem:[#allocation2 + $0x28] sm:$0xff] 0.0
    $region25: #{tpu_custom_call.1} parent=1 // pred_fallthru
      _
    %v54 = vld [vmem:[#allocation2] sm:$0xff]
    %v55 = vld [vmem:[#allocation2 + $0x8] sm:$0xff]
    %v56 = vld [vmem:[#allocation2 + $0x10] sm:$0xff]
    %v57 = vld [vmem:[#allocation2 + $0x18] sm:$0xff]
    %v58 = vld [vmem:[#allocation2 + $0x20] sm:$0xff]
    %v59 = vld [vmem:[#allocation2 + $0x28] sm:$0xff]
    %v60 = vld [vmem:[#allocation3] sm:$0xf]
    %v61 = vld [vmem:[#allocation3 + $0x4] sm:$0xf]
    %v62 = vld [vmem:[#allocation6] sm:$0xff]
    %v63 = vld [vmem:[#allocation6 + $0x8] sm:$0xf]
    %v64 = vld [vmem:[#allocation6 + $0xc] sm:$0xff]
    %v65 = vld [vmem:[#allocation6 + $0x14] sm:$0xf]
    %v66 = vld [vmem:[#allocation6 + $0x18] sm:$0xff]
    %v67 = vld [vmem:[#allocation6 + $0x20] sm:$0xf]
    %v68 = vld [vmem:[#allocation6 + $0x24] sm:$0xff]
    %v69 = vld [vmem:[#allocation6 + $0x2c] sm:$0xf]
    %v70 = vld [vmem:[#allocation6 + $0x30] sm:$0xff]
    %v71 = vld [vmem:[#allocation6 + $0x38] sm:$0xf]
    %v72 = vld [vmem:[#allocation6 + $0x3c] sm:$0xff]
    %v73 = vld [vmem:[#allocation6 + $0x44] sm:$0xf]
    %v74 = vld [vmem:[#allocation6 + $0x48] sm:$0xff]
    %v75 = vld [vmem:[#allocation6 + $0x50] sm:$0xf]
    %v76 = vld [vmem:[#allocation6 + $0x54] sm:$0xff]
    %v77 = vld [vmem:[#allocation6 + $0x5c] sm:$0xf]
    %v78 = vld [vmem:[#allocation6 + $0x60] sm:$0xff]
    %v79 = vld [vmem:[#allocation6 + $0x68] sm:$0xf]
    %v80 = vld [vmem:[#allocation6 + $0x6c] sm:$0xff]
    %v81 = vld [vmem:[#allocation6 + $0x74] sm:$0xf]
    %v82 = vld [vmem:[#allocation6 + $0x78] sm:$0xff]
    %v83 = vld [vmem:[#allocation6 + $0x80] sm:$0xf]
    %v84 = vld [vmem:[#allocation6 + $0x84] sm:$0xff]
    %v85 = vld [vmem:[#allocation6 + $0x8c] sm:$0xf]
    %v86 = vld [vmem:[#allocation6 + $0x90] sm:$0xff]
    %v87 = vld [vmem:[#allocation6 + $0x98] sm:$0xf]
    %v88 = vld [vmem:[#allocation6 + $0x9c] sm:$0xff]
    %v89 = vld [vmem:[#allocation6 + $0xa4] sm:$0xf]
    %v90 = vld [vmem:[#allocation6 + $0xa8] sm:$0xff]
    %v91 = vld [vmem:[#allocation6 + $0xb0] sm:$0xf]
    %v92 = vld [vmem:[#allocation6 + $0xb4] sm:$0xff]
    %v93 = vld [vmem:[#allocation6 + $0xbc] sm:$0xf]
    %v96 = vunpack.c.l.b16 %v60
    %v97 = vunpack.c.l.b16 %v61
    %v98 = vpack.c.b16 %v97, %v96
    %v132 = vunpack.c.l.b16 %v62
    %v133 = vunpack.c.h.b16 %v62
    %v134 = vunpack.c.l.b16 %v63
    %v135 = vunpack.c.l.b16 %v64
    %v136 = vunpack.c.h.b16 %v64
    %v137 = vunpack.c.l.b16 %v65
    %v138 = vunpack.c.l.b16 %v66
    %v139 = vunpack.c.h.b16 %v66
    %v140 = vunpack.c.l.b16 %v67
    %v141 = vunpack.c.l.b16 %v68
    %v142 = vunpack.c.h.b16 %v68
    %v143 = vunpack.c.l.b16 %v69
    %v144 = vunpack.c.l.b16 %v70
    %v145 = vunpack.c.h.b16 %v70
    %v146 = vunpack.c.l.b16 %v71
    %v147 = vunpack.c.l.b16 %v72
    %v148 = vunpack.c.h.b16 %v72
    %v149 = vunpack.c.l.b16 %v73
    %v150 = vunpack.c.l.b16 %v74
    %v151 = vunpack.c.h.b16 %v74
    %v152 = vunpack.c.l.b16 %v75
    %v153 = vunpack.c.l.b16 %v76
    %v154 = vunpack.c.h.b16 %v76
    %v155 = vunpack.c.l.b16 %v77
    %v156 = vunpack.c.l.b16 %v78
    %v157 = vunpack.c.h.b16 %v78
    %v158 = vunpack.c.l.b16 %v79
    %v159 = vunpack.c.l.b16 %v80
    %v160 = vunpack.c.h.b16 %v80
    %v161 = vunpack.c.l.b16 %v81
    %v162 = vunpack.c.l.b16 %v82
    %v163 = vunpack.c.h.b16 %v82
    %v164 = vunpack.c.l.b16 %v83
    %v165 = vunpack.c.l.b16 %v84
    %v166 = vunpack.c.h.b16 %v84
    %v167 = vunpack.c.l.b16 %v85
    %v168 = vunpack.c.l.b16 %v86
    %v169 = vunpack.c.h.b16 %v86
    %v170 = vunpack.c.l.b16 %v87
    %v171 = vunpack.c.l.b16 %v88
    %v172 = vunpack.c.h.b16 %v88
    %v173 = vunpack.c.l.b16 %v89
    %v174 = vunpack.c.l.b16 %v90
    %v175 = vunpack.c.h.b16 %v90
    %v176 = vunpack.c.l.b16 %v91
    %v177 = vunpack.c.l.b16 %v92
    %v178 = vunpack.c.h.b16 %v92
    %v179 = vunpack.c.l.b16 %v93
    %v180 = vpack.c.b16 %v135, %v132
    %v181 = vpack.c.b16 %v136, %v133
    %v182 = vpack.c.b16 %v137, %v134
    %v183 = vpack.c.b16 %v141, %v138
    %v184 = vpack.c.b16 %v142, %v139
    %v185 = vpack.c.b16 %v143, %v140
    %v186 = vpack.c.b16 %v147, %v144
    %v187 = vpack.c.b16 %v148, %v145
    %v188 = vpack.c.b16 %v149, %v146
    %v189 = vpack.c.b16 %v153, %v150
    %v190 = vpack.c.b16 %v154, %v151
    %v191 = vpack.c.b16 %v155, %v152
    %v192 = vpack.c.b16 %v159, %v156
    %v193 = vpack.c.b16 %v160, %v157
    %v194 = vpack.c.b16 %v161, %v158
    %v195 = vpack.c.b16 %v165, %v162
    %v196 = vpack.c.b16 %v166, %v163
    %v197 = vpack.c.b16 %v167, %v164
    %v198 = vpack.c.b16 %v171, %v168
    %v199 = vpack.c.b16 %v172, %v169
    %v200 = vpack.c.b16 %v173, %v170
    %v201 = vpack.c.b16 %v177, %v174
    %v202 = vpack.c.b16 %v178, %v175
    %v203 = vpack.c.b16 %v179, %v176
    %228 = vmatprep.subr.bf16.mxu0 %v181
    %229 = vmatpush1.bf16.msra.mxu0 %v180
    %230 = vmatprep.subr.bf16.mxu0 %v184
    %231 = vmatpush1.bf16.msra.mxu0 %v183
    %232 = vmatprep.subr.bf16.mxu0 %v187
    %233 = vmatpush1.bf16.msra.mxu0 %v186
    %234 = vmatprep.subr.bf16.mxu0 %v190
    %235 = vmatpush1.bf16.msra.mxu0 %v189
    %236 = vmatprep.subr.bf16.mxu0 %v193
    %237 = vmatpush1.bf16.msra.mxu0 %v192
    %238 = vmatprep.subr.bf16.mxu0 %v196
    %239 = vmatpush1.bf16.msra.mxu0 %v195
    %240 = vmatprep.subr.bf16.mxu0 %v199
    %241 = vmatpush1.bf16.msra.mxu0 %v198
    %242 = vmatprep.subr.bf16.mxu0 %v202
    %243 = vmatpush1.bf16.msra.mxu0 %v201
    %244 = vmatprep.subr.bf16.mxu0 0
    %245 = vmatpush1.bf16.msra.mxu0 0
    %246 = vmatprep.subr.bf16.mxu0 0
    %247 = vmatpush1.bf16.msra.mxu0 0
    %248 = vmatprep.subr.bf16.mxu0 0
    %249 = vmatpush1.bf16.msra.mxu0 0
    %250 = vmatprep.subr.bf16.mxu0 0
    %251 = vmatpush1.bf16.msra.mxu0 0
    %252 = vmatprep.subr.bf16.mxu0 0
    %253 = vmatpush1.bf16.msra.mxu0 0
    %254 = vmatprep.subr.bf16.mxu0 0
    %255 = vmatpush1.bf16.msra.mxu0 0
    %256 = vmatprep.subr.bf16.mxu0 0
    %257 = vmatpush1.bf16.msra.mxu0 0
    %258 = vmatprep.subr.bf16.mxu0 0
    %259 = vmatpush1.bf16.msra.mxu0 0
    %260 = vmatprep.mubr.bf16.mxu0 0
    %261 = vmatmul.mubr.bf16.gmra.mrb[0].mxu0 %v98
    %v262 = vpop.f32.mrb[0].mxu0
    %v263 = vadd.f32 0.0, %v262
    %v264 = vpop.f32.mrb[0].mxu0
    %v265 = vadd.f32 0.0, %v264
    %v266 = vpop.f32.mrb[0].mxu0
    %v267 = vadd.f32 0.0, %v266
    %v268 = vpop.f32.mrb[0].mxu0
    %v269 = vadd.f32 0.0, %v268
    %270 = vdwg.mxu0
    %271 = vmatprep.subr.bf16.mxu0 0
    %272 = vmatpush1.bf16.msra.mxu0 %v182
    %273 = vmatprep.subr.bf16.mxu0 0
    %274 = vmatpush1.bf16.msra.mxu0 %v185
    %275 = vmatprep.subr.bf16.mxu0 0
    %276 = vmatpush1.bf16.msra.mxu0 %v188
    %277 = vmatprep.subr.bf16.mxu0 0
    %278 = vmatpush1.bf16.msra.mxu0 %v191
    %279 = vmatprep.subr.bf16.mxu0 0
    %280 = vmatpush1.bf16.msra.mxu0 %v194
    %281 = vmatprep.subr.bf16.mxu0 0
    %282 = vmatpush1.bf16.msra.mxu0 %v197
    %283 = vmatprep.subr.bf16.mxu0 0
    %284 = vmatpush1.bf16.msra.mxu0 %v200
    %285 = vmatprep.subr.bf16.mxu0 0
    %286 = vmatpush1.bf16.msra.mxu0 %v203
    %287 = vmatprep.subr.bf16.mxu0 0
    %288 = vmatpush1.bf16.msra.mxu0 0
    %289 = vmatprep.subr.bf16.mxu0 0
    %290 = vmatpush1.bf16.msra.mxu0 0
    %291 = vmatprep.subr.bf16.mxu0 0
    %292 = vmatpush1.bf16.msra.mxu0 0
    %293 = vmatprep.subr.bf16.mxu0 0
    %294 = vmatpush1.bf16.msra.mxu0 0
    %295 = vmatprep.subr.bf16.mxu0 0
    %296 = vmatpush1.bf16.msra.mxu0 0
    %297 = vmatprep.subr.bf16.mxu0 0
    %298 = vmatpush1.bf16.msra.mxu0 0
    %299 = vmatprep.subr.bf16.mxu0 0
    %300 = vmatpush1.bf16.msra.mxu0 0
    %301 = vmatprep.subr.bf16.mxu0 0
    %302 = vmatpush1.bf16.msra.mxu0 0
    %303 = vmatprep.mubr.bf16.mxu0 0
    %304 = vmatmul.mubr.bf16.gmra.mrb[0].mxu0 %v98
    %v305 = vpop.f32.mrb[0].mxu0
    %v306 = vadd.f32 0.0, %v305
    %v307 = vpop.f32.mrb[0].mxu0
    %v308 = vpop.f32.mrb[0].mxu0
    %v309 = vadd.f32 0.0, %v308
    %v310 = vpop.f32.mrb[0].mxu0
    %311 = vdwg.mxu0
    %v312 = vadd.f32 %v54, %v263
    %v313 = vadd.f32 %v55, %v265
    %v314 = vadd.f32 %v56, %v306
    %v315 = vadd.f32 %v57, %v267
    %v316 = vadd.f32 %v58, %v269
    %v317 = vadd.f32 %v59, %v309
    %318 = vst [vmem:[#allocation2] sm:$0xff] %v312
    %319 = vst [vmem:[#allocation2 + $0x8] sm:$0xff] %v313
    %320 = vst [vmem:[#allocation2 + $0x10] sm:$0xff] %v314
    %321 = vst [vmem:[#allocation2 + $0x18] sm:$0xff] %v315
    %322 = vst [vmem:[#allocation2 + $0x20] sm:$0xff] %v316
    %323 = vst [vmem:[#allocation2 + $0x28] sm:$0xff] %v317
    // Predicated region
    $region26: #{tpu_custom_call.1} parent=1 // pred_check
      %p324 = pneg %p44
    $region27: #{tpu_custom_call.1} parent=1 // pred_check_branch
      %326 = sbr.rel (%p324) target = $region29
    $region28: #{tpu_custom_call.1} parent=1 // pred_region
      %v327 = vld [vmem:[#allocation2] sm:$0xff]
      %v328 = vld [vmem:[#allocation2 + $0x8] sm:$0xff]
      %v329 = vld [vmem:[#allocation2 + $0x10] sm:$0xff]
      %v330 = vld [vmem:[#allocation2 + $0x18] sm:$0xff]
      %v331 = vld [vmem:[#allocation2 + $0x20] sm:$0xff]
      %v332 = vld [vmem:[#allocation2 + $0x28] sm:$0xff]
      %v333 = vld [vmem:[%s2] sm:$0x7]
      %v335 = vlaneseq
      %v336 = vshrl.u32 %v335, 7
      %v337 = vsub.s32 0, %v336
      %v338 = vrot.slane %v333, %v337
      %v339 = vlaneseq
      %v340 = vshrl.u32 %v339, 7
      %v341 = vsub.s32 1, %v340
      %v342 = vrot.slane %v333, %v341
      %v343 = vlaneseq
      %v344 = vshrl.u32 %v343, 7
      %v345 = vsub.s32 2, %v344
      %v346 = vrot.slane %v333, %v345
      %v350 = vadd.f32 %v327, %v338
      %v351 = vadd.f32 %v328, %v342
      %v352 = vadd.f32 %v329, %v346
      %v353 = vadd.f32 %v330, %v338
      %v354 = vadd.f32 %v331, %v342
      %v355 = vadd.f32 %v332, %v346
      %v356 = vpack.c.bf16 %v353, %v350
      %v357 = vpack.c.bf16 %v354, %v351
      %v358 = vpack.c.bf16 %v355, %v352
      %v362 = vunpack.c.l.b16 %v356
      %v363 = vunpack.c.l.b16 %v357
      %v364 = vunpack.c.l.b16 %v358
      %v365 = vunpack.c.h.b16 %v356
      %v366 = vunpack.c.h.b16 %v357
      %v367 = vunpack.c.h.b16 %v358
      %v368 = vpack.c.b16 %v363, %v362
      %v369 = vpack.c.b16 %v364, %v364
      %v370 = vpack.c.b16 %v366, %v365
      %v371 = vpack.c.b16 %v367, %v367
      %376 = vst [vmem:[#allocation8] sm:$0xff] %v368
      %377 = vst [vmem:[#allocation8 + $0x8] sm:$0xf] %v369
      %378 = vst [vmem:[#allocation8 + $0xc] sm:$0xff] %v370
      %379 = vst [vmem:[#allocation8 + $0x14] sm:$0xf] %v371
    $region29: #{tpu_custom_call.1} parent=1 // pred_fallthru
      _
    // Predicated region
    $region30: #{tpu_custom_call.1} parent=1 // pred_check
      _
    $region31: #{tpu_custom_call.1} parent=1 // pred_check_branch
      %381 = sbr.rel (0) target = $region33
    $region32: #{tpu_custom_call.1} parent=1 // pred_region
      %s383 = ssub.s32 384, 384
      %384 = vsyncadd [#allocation5], %s383
      %s385 = sshll.u32 [#allocation8], 4
      %s386 = int_to_ptr.vmem [resolvable:$true] %s385
      %391 = dma.vmem_to_hbm [thread:$0]  %s386, 384, %s3, [#allocation5], 192, 192, 12
    $region33: #{tpu_custom_call.1} parent=1 // pred_fallthru
      _
    // Predicated region
    $region34: #{tpu_custom_call.1} parent=1 // pred_check
      _
    $region35: #{tpu_custom_call.1} parent=1 // pred_check_branch
      %393 = sbr.rel (0) target = $region37
    $region36: #{tpu_custom_call.1} parent=1 // pred_region
      %394 = dma.done [#allocation5], 384
    $region37: #{tpu_custom_call.1} parent=1 // pred_fallthru
      _
    %395 = vsyncpa [#allocation4], 1
    %396 = vsyncpa [#allocation7], 1
    %397 = vsyncpa [#allocation5], 1

</llo_original>
